<compile_context>
chip_gen: v5e
topology: v5e:2x2
jax: 0.10.0
libtpu: 0.0.40
codegen_flags: <defaults>
</compile_context>

<pallas_src>
import jax
import jax.numpy as jnp
from jax.experimental import pallas as pl
from jax.experimental.pallas import tpu as pltpu

# Hyperparameters consistent with the module defaults
# (RES_BLOCK_FILLTERS -> ind, OUTD -> outd = H*W, kernels = 2).
IND = 4          # input channels
KERNELS = 2      # policy-head conv filters
H = W = 8        # board spatial size
OUTD = H * W     # 64, so view(-1, kernels*outd) is consistent
BATCH = 2
BN_EPS = 1e-5

MAX_BLOCK_N = 1024   # batch rows per grid step (VMEM is nowhere near a limit)
NEG_INF = -1e30      # bias for padded logit columns (masked out of softmax)


def _round_up(a, b):
    return (a + b - 1) // b * b


def _policy_kernel(x_ref, wc_ref, shift_ref, wl_ref, bl_ref, out_ref):
    """One batch tile per grid step; everything lane-dense.

    x_ref:     (bn, C*P)    VMEM  input tile, row-major NCHW flatten
    wc_ref:    (C*P, K*P)   VMEM  BN-folded 1x1-conv weight (block-diagonal)
    shift_ref: (1, K*P)     VMEM  BN-folded per-column shift
    wl_ref:    (K*P, OUTP)  VMEM  linear weight (transposed), zero-padded cols
    bl_ref:    (1, OUTP)    VMEM  linear bias, padding cols = -1e30
    out_ref:   (bn, OUTP)   VMEM  log-probabilities (real cols are [:outd])
    """
    # 1x1 conv + folded eval-mode BN as one 256-deep MXU matmul, then ReLU.
    hidden = jnp.dot(x_ref[...], wc_ref[...],
                     preferred_element_type=jnp.float32)
    hidden = jnp.maximum(hidden + shift_ref[...], 0.0)

    # Linear layer: 128-deep contraction, 128-lane (padded) output.
    logits = jnp.dot(hidden, wl_ref[...],
                     preferred_element_type=jnp.float32) + bl_ref[...]

    # Numerically stable log_softmax along the last dim.  Padding columns
    # carry ~-1e30 logits so they contribute ~0 to the sum and never win max.
    m = jnp.max(logits, axis=-1, keepdims=True)
    s = logits - m
    lse = jnp.log(jnp.sum(jnp.exp(s), axis=-1, keepdims=True))
    out_ref[...] = s - lse


@jax.jit
def policy_forward(x_nchw, conv_w, conv_b, bn_gamma, bn_beta, bn_mean, bn_var,
                   lin_w, lin_b):
    """x_nchw: (N, C, H, W) float32. Returns (N, outd) log-probabilities."""
    N, C, h, w = x_nchw.shape
    P = h * w
    K = conv_w.shape[0]
    outd = lin_w.shape[0]
    CP, KP = C * P, K * P
    OUTP = _round_up(outd, 128)          # lane-dense padded output width

    # --- parameter folding (plain JAX glue) ----------------------------------
    scale = bn_gamma / jnp.sqrt(bn_var + BN_EPS)                        # (K,)
    wc_scaled = (scale[:, None] * conv_w.reshape(K, C)).astype(jnp.float32)
    shift = (scale * (conv_b - bn_mean) + bn_beta).astype(jnp.float32)  # (K,)

    # Block-diagonal conv weight: Wc[c*P+p, k*P+q] = wc_scaled[k, c] * (p==q),
    # so hidden = x_flat @ Wc reproduces the channel-major view(-1, K*P).
    eye = jnp.eye(P, dtype=jnp.float32)
    wc_big = jnp.einsum('kc,pq->cpkq', wc_scaled, eye).reshape(CP, KP)
    shift_row = jnp.repeat(shift, P).reshape(1, KP)

    # Linear weight / bias padded to 128 output lanes: zero weight, -1e30 bias
    # in padding columns so log_softmax ignores them.
    wl = jnp.zeros((KP, OUTP), jnp.float32).at[:, :outd].set(
        lin_w.T.astype(jnp.float32))
    bl = jnp.full((1, OUTP), NEG_INF, jnp.float32).at[0, :outd].set(
        lin_b.astype(jnp.float32))

    # Lane-dense input slab: (N, C*P) is a free bitcast of NCHW (no transpose).
    x = x_nchw.reshape(N, CP).astype(jnp.float32)

    # --- batch tiling ---------------------------------------------------------
    n_pad = _round_up(N, 8)
    if n_pad <= 512:
        block_n = n_pad                  # small batch: single grid step
    else:
        # Keep >= 2 grid steps so the parallel axis shards across v7x's 2 TCs.
        block_n = min(MAX_BLOCK_N, _round_up(-(-n_pad // 2), 8))
        n_pad = _round_up(n_pad, block_n)
    if n_pad != N:
        x = jnp.pad(x, ((0, n_pad - N), (0, 0)))
    grid = (n_pad // block_n,)

    out = pl.pallas_call(
        _policy_kernel,
        out_shape=jax.ShapeDtypeStruct((n_pad, OUTP), jnp.float32),
        grid=grid,
        in_specs=[
            pl.BlockSpec((block_n, CP), lambda i: (i, 0)),   # x batch tile
            pl.BlockSpec((CP, KP), lambda i: (0, 0)),        # conv weight (resident)
            pl.BlockSpec((1, KP), lambda i: (0, 0)),         # conv shift  (resident)
            pl.BlockSpec((KP, OUTP), lambda i: (0, 0)),      # linear weight (resident)
            pl.BlockSpec((1, OUTP), lambda i: (0, 0)),       # linear bias (resident)
        ],
        out_specs=pl.BlockSpec((block_n, OUTP), lambda i: (i, 0)),
        compiler_params=pltpu.CompilerParams(
            dimension_semantics=("parallel",)),
    )(x, wc_big, shift_row, wl, bl)
    return out[:N, :outd]


def _reference_forward(x_nchw, conv_w, conv_b, bn_gamma, bn_beta, bn_mean,
                       bn_var, lin_w, lin_b):
    """Pure-JAX reference matching the PyTorch forward (eval-mode BN)."""
    N, C, h, w = x_nchw.shape
    K = conv_w.shape[0]
    y = jnp.einsum('kc,nchw->nkhw', conv_w.reshape(K, C), x_nchw) \
        + conv_b.reshape(1, K, 1, 1)
    y = (y - bn_mean.reshape(1, K, 1, 1)) / jnp.sqrt(
        bn_var.reshape(1, K, 1, 1) + BN_EPS)
    y = y * bn_gamma.reshape(1, K, 1, 1) + bn_beta.reshape(1, K, 1, 1)
    y = jnp.maximum(y, 0.0)
    flat = y.reshape(N, K * h * w)
    logits = flat @ lin_w.T + lin_b
    return jax.nn.log_softmax(logits, axis=-1)


if __name__ == "__main__":
    key = jax.random.PRNGKey(0)
    keys = jax.random.split(key, 8)

    x = jax.random.normal(keys[0], (BATCH, IND, H, W), dtype=jnp.float32)

    # Deterministic synthetic parameters (shapes per nn.Module __init__).
    conv_w = 0.1 * jax.random.normal(keys[1], (KERNELS, IND, 1, 1), jnp.float32)
    conv_b = 0.05 * jax.random.normal(keys[2], (KERNELS,), jnp.float32)
    bn_gamma = 1.0 + 0.1 * jax.random.normal(keys[3], (KERNELS,), jnp.float32)
    bn_beta = 0.1 * jax.random.normal(keys[4], (KERNELS,), jnp.float32)
    bn_mean = 0.1 * jax.random.normal(keys[5], (KERNELS,), jnp.float32)
    bn_var = 1.0 + 0.1 * jnp.abs(jax.random.normal(keys[5], (KERNELS,),
                                                   jnp.float32))
    lin_w = 0.1 * jax.random.normal(keys[6], (OUTD, KERNELS * OUTD), jnp.float32)
    lin_b = 0.05 * jax.random.normal(keys[7], (OUTD,), jnp.float32)

    out = policy_forward(x, conv_w, conv_b, bn_gamma, bn_beta, bn_mean, bn_var,
                         lin_w, lin_b)
    out = jax.block_until_ready(out)

    ref = _reference_forward(x, conv_w, conv_b, bn_gamma, bn_beta, bn_mean,
                             bn_var, lin_w, lin_b)
    assert out.shape == (BATCH, OUTD)
    assert jnp.allclose(out, ref, atol=1e-4, rtol=1e-4), "mismatch vs reference"

    print("KERNEL_OK")
</pallas_src>

<mosaic_0001>
module attributes {stable_mosaic.version = 11 : i64} {
  func.func @_policy_kernel(%arg0: i32, %arg1: memref<8x256xf32, #tpu.memory_space<vmem>>, %arg2: memref<256x128xf32, #tpu.memory_space<vmem>>, %arg3: memref<1x128xf32, #tpu.memory_space<vmem>>, %arg4: memref<128x128xf32, #tpu.memory_space<vmem>>, %arg5: memref<1x128xf32, #tpu.memory_space<vmem>>, %arg6: memref<8x128xf32, #tpu.memory_space<vmem>>) attributes {dimension_semantics = [#tpu.dimension_semantics<parallel>], iteration_bounds = array<i64: 1>, scalar_prefetch = 0 : i64, scratch_operands = 0 : i64, tpu.core_type = #tpu.core_type<tc>, window_params = [{transform_indices = @transform_0, window_bounds = array<i64: 8, 256>}, {pipeline_mode = #tpu.pipeline_mode<synchronous>, transform_indices = @transform_1, window_bounds = array<i64: 256, 128>}, {pipeline_mode = #tpu.pipeline_mode<synchronous>, transform_indices = @transform_2, window_bounds = array<i64: 1, 128>}, {pipeline_mode = #tpu.pipeline_mode<synchronous>, transform_indices = @transform_3, window_bounds = array<i64: 128, 128>}, {pipeline_mode = #tpu.pipeline_mode<synchronous>, transform_indices = @transform_4, window_bounds = array<i64: 1, 128>}, {transform_indices = @transform_5, window_bounds = array<i64: 8, 128>}]} {
    %c0 = arith.constant 0 : index
    %c0_0 = arith.constant 0 : index
    %0 = vector.load %arg1[%c0, %c0_0] : memref<8x256xf32, #tpu.memory_space<vmem>>, vector<8x256xf32>
    %c0_1 = arith.constant 0 : index
    %c0_2 = arith.constant 0 : index
    %1 = vector.load %arg2[%c0_1, %c0_2] : memref<256x128xf32, #tpu.memory_space<vmem>>, vector<256x128xf32>
    %cst = arith.constant dense<0.000000e+00> : vector<8x128xf32>
    %2 = tpu.matmul %0, %1, %cst {dimension_numbers = #tpu.dot_dimension_numbers<[1], [0], [0], [1], [0, 0, 1, 1], [], []>} : vector<8x256xf32>, vector<256x128xf32>, vector<8x128xf32> -> vector<8x128xf32>
    %c0_3 = arith.constant 0 : index
    %c0_4 = arith.constant 0 : index
    %3 = vector.load %arg3[%c0_3, %c0_4] : memref<1x128xf32, #tpu.memory_space<vmem>>, vector<1x128xf32>
    %4 = vector.broadcast %3 : vector<1x128xf32> to vector<8x128xf32>
    %5 = arith.addf %2, %4 : vector<8x128xf32>
    %cst_5 = arith.constant 0.000000e+00 : f32
    %6 = vector.broadcast %cst_5 : f32 to vector<8x128xf32>
    %7 = arith.maximumf %5, %6 : vector<8x128xf32>
    %c0_6 = arith.constant 0 : index
    %c0_7 = arith.constant 0 : index
    %8 = vector.load %arg4[%c0_6, %c0_7] : memref<128x128xf32, #tpu.memory_space<vmem>>, vector<128x128xf32>
    %cst_8 = arith.constant dense<0.000000e+00> : vector<8x128xf32>
    %9 = tpu.matmul %7, %8, %cst_8 {dimension_numbers = #tpu.dot_dimension_numbers<[1], [0], [0], [1], [0, 0, 1, 1], [], []>} : vector<8x128xf32>, vector<128x128xf32>, vector<8x128xf32> -> vector<8x128xf32>
    %c0_9 = arith.constant 0 : index
    %c0_10 = arith.constant 0 : index
    %10 = vector.load %arg5[%c0_9, %c0_10] : memref<1x128xf32, #tpu.memory_space<vmem>>, vector<1x128xf32>
    %11 = vector.broadcast %10 : vector<1x128xf32> to vector<8x128xf32>
    %12 = arith.addf %9, %11 : vector<8x128xf32>
    %cst_11 = arith.constant dense<0xFF800000> : vector<8xf32>
    %13 = vector.multi_reduction <maximumf>, %12, %cst_11 [1] : vector<8x128xf32> to vector<8xf32>
    %14 = vector.shape_cast %13 : vector<8xf32> to vector<8x1xf32>
    %15 = vector.broadcast %14 : vector<8x1xf32> to vector<8x128xf32>
    %16 = arith.subf %12, %15 : vector<8x128xf32>
    %17 = math.exp %16 : vector<8x128xf32>
    %cst_12 = arith.constant dense<0.000000e+00> : vector<8xf32>
    %18 = vector.multi_reduction <add>, %17, %cst_12 [1] : vector<8x128xf32> to vector<8xf32>
    %19 = vector.shape_cast %18 : vector<8xf32> to vector<8x1xf32>
    %20 = math.log %19 : vector<8x1xf32>
    %21 = vector.broadcast %20 : vector<8x1xf32> to vector<8x128xf32>
    %22 = arith.subf %16, %21 : vector<8x128xf32>
    %c0_13 = arith.constant 0 : index
    %c0_14 = arith.constant 0 : index
    %23 = vector.load %arg6[%c0_13, %c0_14] : memref<8x128xf32, #tpu.memory_space<vmem>>, vector<8x128xf32>
    tpu.vector_store %arg6[%c0_13, %c0_14], %22 {strides = array<i32>} : memref<8x128xf32, #tpu.memory_space<vmem>>, vector<8x128xf32>,
    return
  }
  func.func @transform_0(%arg0: i32) -> (i32, i32) {
    %c0_i32 = arith.constant 0 : i32
    %c0_i32_0 = arith.constant 0 : i32
    return %arg0, %c0_i32 : i32, i32
  }
  func.func @transform_1(%arg0: i32) -> (i32, i32) {
    %c0_i32 = arith.constant 0 : i32
    %c0_i32_0 = arith.constant 0 : i32
    %c0_i32_1 = arith.constant 0 : i32
    return %c0_i32, %c0_i32_0 : i32, i32
  }
  func.func @transform_2(%arg0: i32) -> (i32, i32) {
    %c0_i32 = arith.constant 0 : i32
    %c0_i32_0 = arith.constant 0 : i32
    %c0_i32_1 = arith.constant 0 : i32
    return %c0_i32, %c0_i32_0 : i32, i32
  }
  func.func @transform_3(%arg0: i32) -> (i32, i32) {
    %c0_i32 = arith.constant 0 : i32
    %c0_i32_0 = arith.constant 0 : i32
    %c0_i32_1 = arith.constant 0 : i32
    return %c0_i32, %c0_i32_0 : i32, i32
  }
  func.func @transform_4(%arg0: i32) -> (i32, i32) {
    %c0_i32 = arith.constant 0 : i32
    %c0_i32_0 = arith.constant 0 : i32
    %c0_i32_1 = arith.constant 0 : i32
    return %c0_i32, %c0_i32_0 : i32, i32
  }
  func.func @transform_5(%arg0: i32) -> (i32, i32) {
    %c0_i32 = arith.constant 0 : i32
    %c0_i32_0 = arith.constant 0 : i32
    return %arg0, %c0_i32 : i32, i32
  }
}

</mosaic_0001>

<llo_original>
// kernel: policy_forward.1
$region0: #{policy_forward.1}
  #allocation0 [shape = 'u32[]', space=smem, size = 0x4, offset = 0x4, fixed_abs, tag = 'smem constant byte address 0x4 - core index']
  #allocation1 [shape = 'u32[72,128]{1,0:T(1,128)}', space=vmem, size = 0x9000, scoped, tag = 'internal scratch']
  %s0 = inlined_call_operand.vmem [shape: f32[8,256], index: 0, kind: input, shape index: {}]
  %s1 = inlined_call_operand.vmem [shape: f32[256,128], index: 1, kind: input, shape index: {}]
  %s2 = inlined_call_operand.vmem [shape: f32[1,128], index: 2, kind: input, shape index: {}]
  %s3 = inlined_call_operand.vmem [shape: f32[128,128], index: 3, kind: input, shape index: {}]
  %s4 = inlined_call_operand.vmem [shape: f32[1,128], index: 4, kind: input, shape index: {}]
  %s5 = inlined_call_operand.vmem [shape: f32[8,128], index: 5, kind: output, shape index: {}]
  %s6 = sld [smem:[#allocation0]]
  $region30: #{policy_forward.1} parent=0
    _
  %s8 = ssub.s32 1, %s6
  %s9 = scalar_select 0, %s8, %s6
  // Predicated region
  $region2: #{policy_forward.1} parent=0 // pred_check
    _
  $region3: #{policy_forward.1} parent=0 // pred_check_branch
    %11 = sbr.rel (0) target = $region5
  $region4: #{policy_forward.1} parent=0 // pred_region
    _
  $region5: #{policy_forward.1} parent=0 // pred_fallthru
    _
  // Predicated region
  $region6: #{policy_forward.1} parent=0 // pred_check
    _
  $region7: #{policy_forward.1} parent=0 // pred_check_branch
    %13 = sbr.rel (0) target = $region9
  $region8: #{policy_forward.1} parent=0 // pred_region
    _
  $region9: #{policy_forward.1} parent=0 // pred_fallthru
    _
  // Predicated region
  $region10: #{policy_forward.1} parent=0 // pred_check
    _
  $region11: #{policy_forward.1} parent=0 // pred_check_branch
    %15 = sbr.rel (0) target = $region13
  $region12: #{policy_forward.1} parent=0 // pred_region
    _
  $region13: #{policy_forward.1} parent=0 // pred_fallthru
    _
  // Predicated region
  $region14: #{policy_forward.1} parent=0 // pred_check
    _
  $region15: #{policy_forward.1} parent=0 // pred_check_branch
    %17 = sbr.rel (0) target = $region17
  $region16: #{policy_forward.1} parent=0 // pred_region
    _
  $region17: #{policy_forward.1} parent=0 // pred_fallthru
    _
  // Predicated region
  $region18: #{policy_forward.1} parent=0 // pred_check
    _
  $region19: #{policy_forward.1} parent=0 // pred_check_branch
    %19 = sbr.rel (0) target = $region21
  $region20: #{policy_forward.1} parent=0 // pred_region
    _
  $region21: #{policy_forward.1} parent=0 // pred_fallthru
    _
  %v20 = vld [vmem:[%s0] sm:$0xff]
  %v21 = vld [vmem:[%s0 + $0x8] sm:$0xff]
  %v22 = vld [vmem:[%s1] sm:$0xff]
  %v23 = vld [vmem:[%s1 + $0x8] sm:$0xff]
  %v24 = vld [vmem:[%s1 + $0x10] sm:$0xff]
  %v25 = vld [vmem:[%s1 + $0x18] sm:$0xff]
  %v26 = vld [vmem:[%s1 + $0x20] sm:$0xff]
  %v27 = vld [vmem:[%s1 + $0x28] sm:$0xff]
  %v28 = vld [vmem:[%s1 + $0x30] sm:$0xff]
  %v29 = vld [vmem:[%s1 + $0x38] sm:$0xff]
  %v30 = vld [vmem:[%s1 + $0x40] sm:$0xff]
  %v31 = vld [vmem:[%s1 + $0x48] sm:$0xff]
  %v32 = vld [vmem:[%s1 + $0x50] sm:$0xff]
  %v33 = vld [vmem:[%s1 + $0x58] sm:$0xff]
  %v34 = vld [vmem:[%s1 + $0x60] sm:$0xff]
  %v35 = vld [vmem:[%s1 + $0x68] sm:$0xff]
  %v36 = vld [vmem:[%s1 + $0x70] sm:$0xff]
  %v37 = vld [vmem:[%s1 + $0x78] sm:$0xff]
  %v38 = vld [vmem:[%s1 + $0x80] sm:$0xff]
  %v39 = vld [vmem:[%s1 + $0x88] sm:$0xff]
  %v40 = vld [vmem:[%s1 + $0x90] sm:$0xff]
  %v41 = vld [vmem:[%s1 + $0x98] sm:$0xff]
  %v42 = vld [vmem:[%s1 + $0xa0] sm:$0xff]
  %v43 = vld [vmem:[%s1 + $0xa8] sm:$0xff]
  %v44 = vld [vmem:[%s1 + $0xb0] sm:$0xff]
  %v45 = vld [vmem:[%s1 + $0xb8] sm:$0xff]
  %v46 = vld [vmem:[%s1 + $0xc0] sm:$0xff]
  %v47 = vld [vmem:[%s1 + $0xc8] sm:$0xff]
  %v48 = vld [vmem:[%s1 + $0xd0] sm:$0xff]
  %v49 = vld [vmem:[%s1 + $0xd8] sm:$0xff]
  %v50 = vld [vmem:[%s1 + $0xe0] sm:$0xff]
  %v51 = vld [vmem:[%s1 + $0xe8] sm:$0xff]
  %v52 = vld [vmem:[%s1 + $0xf0] sm:$0xff]
  %v53 = vld [vmem:[%s1 + $0xf8] sm:$0xff]
  %v54 = vld [vmem:[%s2] sm:$0x1]
  %v56 = vperm.slane %v54, 0
  %58 = vmatpush.msra.mxu0 %v37
  %59 = vmatpush.msra.mxu0 %v36
  %60 = vmatpush.msra.mxu0 %v35
  %61 = vmatpush.msra.mxu0 %v34
  %62 = vmatpush.msra.mxu0 %v33
  %63 = vmatpush.msra.mxu0 %v32
  %64 = vmatpush.msra.mxu0 %v31
  %65 = vmatpush.msra.mxu0 %v30
  %66 = vmatpush.msra.mxu0 %v29
  %67 = vmatpush.msra.mxu0 %v28
  %68 = vmatpush.msra.mxu0 %v27
  %69 = vmatpush.msra.mxu0 %v26
  %70 = vmatpush.msra.mxu0 %v25
  %71 = vmatpush.msra.mxu0 %v24
  %72 = vmatpush.msra.mxu0 %v23
  %73 = vmatpush.msra.mxu0 %v22
  %74 = vmatmul.f32.gmra.mxu0 %v20
  %v75 = vpop.f32.mrf.mxu0
  %v76 = vadd.f32 %v56, %v75
  %77 = vdwg.mxu0
  %78 = vmatpush.msra.mxu0 %v53
  %79 = vmatpush.msra.mxu0 %v52
  %80 = vmatpush.msra.mxu0 %v51
  %81 = vmatpush.msra.mxu0 %v50
  %82 = vmatpush.msra.mxu0 %v49
  %83 = vmatpush.msra.mxu0 %v48
  %84 = vmatpush.msra.mxu0 %v47
  %85 = vmatpush.msra.mxu0 %v46
  %86 = vmatpush.msra.mxu0 %v45
  %87 = vmatpush.msra.mxu0 %v44
  %88 = vmatpush.msra.mxu0 %v43
  %89 = vmatpush.msra.mxu0 %v42
  %90 = vmatpush.msra.mxu0 %v41
  %91 = vmatpush.msra.mxu0 %v40
  %92 = vmatpush.msra.mxu0 %v39
  %93 = vmatpush.msra.mxu0 %v38
  %94 = vmatmul.f32.gmra.mxu0 %v21
  %v95 = vpop.f32.mrf.mxu0
  %v96 = vadd.f32 %v76, %v95
  %97 = vdwg.mxu0
  %v98 = vmax.f32 %v96, 0.0
  %v99 = vld [vmem:[%s3] sm:$0xff]
  %v100 = vld [vmem:[%s3 + $0x8] sm:$0xff]
  %v101 = vld [vmem:[%s3 + $0x10] sm:$0xff]
  %v102 = vld [vmem:[%s3 + $0x18] sm:$0xff]
  %v103 = vld [vmem:[%s3 + $0x20] sm:$0xff]
  %v104 = vld [vmem:[%s3 + $0x28] sm:$0xff]
  %v105 = vld [vmem:[%s3 + $0x30] sm:$0xff]
  %v106 = vld [vmem:[%s3 + $0x38] sm:$0xff]
  %v107 = vld [vmem:[%s3 + $0x40] sm:$0xff]
  %v108 = vld [vmem:[%s3 + $0x48] sm:$0xff]
  %v109 = vld [vmem:[%s3 + $0x50] sm:$0xff]
  %v110 = vld [vmem:[%s3 + $0x58] sm:$0xff]
  %v111 = vld [vmem:[%s3 + $0x60] sm:$0xff]
  %v112 = vld [vmem:[%s3 + $0x68] sm:$0xff]
  %v113 = vld [vmem:[%s3 + $0x70] sm:$0xff]
  %v114 = vld [vmem:[%s3 + $0x78] sm:$0xff]
  %v115 = vld [vmem:[%s4] sm:$0x1]
  %v117 = vperm.slane %v115, 0
  %119 = vmatpush.msra.mxu0 %v114
  %120 = vmatpush.msra.mxu0 %v113
  %121 = vmatpush.msra.mxu0 %v112
  %122 = vmatpush.msra.mxu0 %v111
  %123 = vmatpush.msra.mxu0 %v110
  %124 = vmatpush.msra.mxu0 %v109
  %125 = vmatpush.msra.mxu0 %v108
  %126 = vmatpush.msra.mxu0 %v107
  %127 = vmatpush.msra.mxu0 %v106
  %128 = vmatpush.msra.mxu0 %v105
  %129 = vmatpush.msra.mxu0 %v104
  %130 = vmatpush.msra.mxu0 %v103
  %131 = vmatpush.msra.mxu0 %v102
  %132 = vmatpush.msra.mxu0 %v101
  %133 = vmatpush.msra.mxu0 %v100
  %134 = vmatpush.msra.mxu0 %v99
  %135 = vmatmul.f32.gmra.mxu0 %v98
  %v136 = vpop.f32.mrf.mxu0
  %v137 = vadd.f32 %v117, %v136
  %138 = vdwg.mxu0
  %139 = vmax.xlane.f32.xlu0 %v137
  %v140 = vpop.xlane.xlu0 %139
  %v141 = vsub.f32 %v137, %v140
  %v142 = vmul.f32 %v141, 1.442695
  %v143 = vpow.pop %v142
  %144 = vadd.xlane.f32.xlu0 %v143
  %v145 = vpop.xlane.xlu0 %144
  %v146 = vlog2.pop %v145
  %v147 = vmul.f32 %v146, 0.6931472
  %v148 = vsub.f32 %v141, %v147
  %149 = vst [vmem:[%s5] sm:$0xff] %v148
  // Predicated region
  $region22: #{policy_forward.1} parent=0 // pred_check
    _
  $region23: #{policy_forward.1} parent=0 // pred_check_branch
    %151 = sbr.rel (0) target = $region25
  $region24: #{policy_forward.1} parent=0 // pred_region
    _
  $region25: #{policy_forward.1} parent=0 // pred_fallthru
    _
  // Predicated region
  $region26: #{policy_forward.1} parent=0 // pred_check
    _
  $region27: #{policy_forward.1} parent=0 // pred_check_branch
    %153 = sbr.rel (0) target = $region29
  $region28: #{policy_forward.1} parent=0 // pred_region
    _
  $region29: #{policy_forward.1} parent=0 // pred_fallthru
    _

</llo_original>
